<compile_context>
chip_gen: v7x
topology: tpu7x:2x2x1
jax: 0.10.0
libtpu: 0.0.40
codegen_flags: <defaults>
</compile_context>

<pallas_src>
import functools

import jax
import jax.numpy as jnp
from jax.experimental import pallas as pl
from jax.experimental.pallas import tpu as pltpu


def _ssim_kernel(x1_ref, x2_ref, t_ref, out_ref, *, C1, C2):
    # x*_ref: (B, H, PW) tile of lane-packed images.
    # t_ref : (PW, PW) block-diagonal Toeplitz = zero-padded 1-D Gaussian blur
    #         along W, applied independently per packed image.
    B, H, PW = x1_ref.shape
    n = B * H
    x1 = x1_ref[...].astype(jnp.float32).reshape(n, PW)
    x2 = x2_ref[...].astype(jnp.float32).reshape(n, PW)
    T = t_ref[...]

    # Fuse the five Gaussian blurs into a single MXU matmul (T is pushed into
    # the MXU weight registers once per step instead of five times).
    L = jnp.concatenate([x1, x2, x1 * x1, x2 * x2, x1 * x2], axis=0)
    R = jnp.dot(L, T, preferred_element_type=jnp.float32)

    mux = R[0 * n:1 * n]
    muy = R[1 * n:2 * n]
    ex2 = R[2 * n:3 * n]
    ey2 = R[3 * n:4 * n]
    exy = R[4 * n:5 * n]

    mux2 = mux * mux
    muy2 = muy * muy
    muxy = mux * muy
    sxx = ex2 - mux2          # E[x^2] - mu^2, same formulation as the reference
    syy = ey2 - muy2
    sxy = exy - muxy

    # Single divide: l = a/b, cs = c/d  ->  ssim = (a*c)/(b*d).
    num = (2.0 * muxy + C1) * (2.0 * sxy + C2)
    den = (mux2 + muy2 + C1) * (sxx + syy + C2)
    ssim = num / den

    # Only a row (sublane) reduction per step; the cross-lane / cross-step
    # reduction happens once in the wrapper (keeps the grid axis parallel).
    out_ref[...] = jnp.sum(ssim, axis=0, keepdims=True).reshape(1, 1, PW)


def _largest_divisor_leq(n, cap):
    cap = int(max(1, min(n, cap)))
    for d in range(cap, 0, -1):
        if n % d == 0:
            return d
    return 1


def ssim_loss(input1, input2, C1=0.01 ** 2, C2=0.03 ** 2, sigma=5.0):
    if input1.shape != input2.shape:
        raise ValueError("Inputs must have the same dimension.")
    N, C, H, W = input1.shape
    kernel_size = int(2 * round(3 * sigma) + 1)
    if kernel_size % 2 == 0:
        raise ValueError("Odd kernel size preferred")
    half = kernel_size // 2

    # 1 x kernel_size Gaussian (same math as SSIMLoss.gaussian_filter;
    # torch.range is end-inclusive).
    k = jnp.arange(-half, half + 1, dtype=jnp.float32)
    g = jnp.exp(-0.5 * k ** 2 / (sigma ** 2))
    g = g / jnp.sum(g)

    M = N * C
    # Keep f32/bf16 native for the DMA (bf16 halves HBM traffic); other dtypes
    # are promoted.  All SSIM math is done in f32 inside the kernel.
    if input1.dtype not in (jnp.float32, jnp.bfloat16):
        input1 = input1.astype(jnp.float32)
        input2 = input2.astype(jnp.float32)
    x1 = input1.reshape(M, H, W)
    x2 = input2.reshape(M, H, W)

    # Lane packing for small W: put P images side by side along the lane axis.
    P = 1 if W >= 128 else _largest_divisor_leq(M, max(1, 128 // W))
    PW = P * W
    Mg = M // P
    if P > 1:
        x1 = x1.reshape(Mg, P, H, W).transpose(0, 2, 1, 3).reshape(Mg, H, PW)
        x2 = x2.reshape(Mg, P, H, W).transpose(0, 2, 1, 3).reshape(Mg, H, PW)

    # Block-diagonal Toeplitz: (row @ T)[:, w] == zero-padded 1-D Gaussian
    # convolution along W, independently per packed image.
    j = jnp.arange(PW)[:, None]
    w = jnp.arange(PW)[None, :]
    d = j - w + half
    T = jnp.where(
        (d >= 0) & (d < kernel_size) & ((j // W) == (w // W)),
        g[jnp.clip(d, 0, kernel_size - 1)],
        0.0,
    ).astype(jnp.float32)
    # TODO(synk): for very large W (>=2048) band-block T (only the 3 adjacent
    # 128-lane blocks are nonzero) and add an H-tiling grid axis so tiles + T
    # fit v7x's 64 MiB VMEM; optionally single-buffer T (pl.Buffered(1)).

    # Batch B lane-groups per grid step (amortize per-step overhead, taller
    # MXU LHS) while keeping the input tile modest for VMEM.
    bytes_per_group = H * PW * 4
    B = _largest_divisor_leq(Mg, max(1, (2 << 20) // bytes_per_group))
    while B > 1 and B * H > 1024:
        B = _largest_divisor_leq(Mg, B - 1)
    G = Mg // B

    # Rough VMEM estimate (2 double-buffered inputs, double-buffered T, fused
    # matmul operands + elementwise temps); bump the scoped limit only if the
    # conservative default (16 MiB on v5e) would be too small.
    tile_bytes = B * bytes_per_group
    est = 4 * tile_bytes + 2 * int(T.size) * 4 + 18 * B * H * PW * 4
    vmem_limit = None
    if est > (12 << 20):
        vmem_limit = int(min(max(2 * est, 32 << 20), 64 << 20))

    kernel = functools.partial(_ssim_kernel, C1=float(C1), C2=float(C2))
    partial_sums = pl.pallas_call(
        kernel,
        out_shape=jax.ShapeDtypeStruct((G, 1, PW), jnp.float32),
        grid=(G,),
        in_specs=[
            pl.BlockSpec((B, H, PW), lambda i: (i, 0, 0)),
            pl.BlockSpec((B, H, PW), lambda i: (i, 0, 0)),
            pl.BlockSpec((PW, PW), lambda i: (0, 0)),
        ],
        out_specs=pl.BlockSpec((1, 1, PW), lambda i: (i, 0, 0)),
        compiler_params=pltpu.CompilerParams(
            dimension_semantics=("parallel",),
            vmem_limit_bytes=vmem_limit,
        ),
    )(x1, x2, T)

    # The reference's F.conv2d(padding=15) with a 1x31 kernel grows H by
    # 2*half rows whose SSIM is exactly 1.0; fold that constant contribution
    # into the mean instead of blurring rows of zeros.
    count = float(M * (H + 2 * half) * W)
    pad_sum = float(M * 2 * half * W)
    return 1.0 - (jnp.sum(partial_sums, dtype=jnp.float32) + pad_sum) / count


if __name__ == "__main__":
    key = jax.random.PRNGKey(0)
    k1, k2 = jax.random.split(key)
    shape = (2, 4, 16, 16)  # N, C, H, W
    a = jax.random.uniform(k1, shape, dtype=jnp.float32)
    b = jax.random.uniform(k2, shape, dtype=jnp.float32)

    loss = ssim_loss(a, b)
    jax.block_until_ready(loss)
    print("KERNEL_OK")
</pallas_src>

<mosaic_0001>
module attributes {stable_mosaic.version = 11 : i64} {
  func.func @_ssim_kernel(%arg0: i32, %arg1: memref<1x16x128xf32, #tpu.memory_space<vmem>>, %arg2: memref<1x16x128xf32, #tpu.memory_space<vmem>>, %arg3: memref<128x128xf32, #tpu.memory_space<vmem>>, %arg4: memref<1x1x128xf32, #tpu.memory_space<vmem>>) attributes {dimension_semantics = [#tpu.dimension_semantics<parallel>], iteration_bounds = array<i64: 1>, scalar_prefetch = 0 : i64, scratch_operands = 0 : i64, tpu.core_type = #tpu.core_type<tc>, window_params = [{transform_indices = @transform_0, window_bounds = array<i64: 1, 16, 128>}, {transform_indices = @transform_1, window_bounds = array<i64: 1, 16, 128>}, {pipeline_mode = #tpu.pipeline_mode<synchronous>, transform_indices = @transform_2, window_bounds = array<i64: 128, 128>}, {transform_indices = @transform_3, window_bounds = array<i64: 1, 1, 128>}]} {
    %c0 = arith.constant 0 : index
    %c0_0 = arith.constant 0 : index
    %c0_1 = arith.constant 0 : index
    %0 = vector.load %arg1[%c0, %c0_0, %c0_1] : memref<1x16x128xf32, #tpu.memory_space<vmem>>, vector<1x16x128xf32>
    %1 = vector.shape_cast %0 : vector<1x16x128xf32> to vector<16x128xf32>
    %c0_2 = arith.constant 0 : index
    %c0_3 = arith.constant 0 : index
    %c0_4 = arith.constant 0 : index
    %2 = vector.load %arg2[%c0_2, %c0_3, %c0_4] : memref<1x16x128xf32, #tpu.memory_space<vmem>>, vector<1x16x128xf32>
    %3 = vector.shape_cast %2 : vector<1x16x128xf32> to vector<16x128xf32>
    %c0_5 = arith.constant 0 : index
    %c0_6 = arith.constant 0 : index
    %4 = vector.load %arg3[%c0_5, %c0_6] : memref<128x128xf32, #tpu.memory_space<vmem>>, vector<128x128xf32>
    %5 = arith.mulf %1, %1 : vector<16x128xf32>
    %6 = arith.mulf %3, %3 : vector<16x128xf32>
    %7 = arith.mulf %1, %3 : vector<16x128xf32>
    %8 = tpu.concatenate %1, %3, %5, %6, %7 in 0 : vector<16x128xf32>, vector<16x128xf32>, vector<16x128xf32>, vector<16x128xf32>, vector<16x128xf32> -> vector<80x128xf32>
    %cst = arith.constant dense<0.000000e+00> : vector<80x128xf32>
    %9 = tpu.matmul %8, %4, %cst {dimension_numbers = #tpu.dot_dimension_numbers<[1], [0], [0], [1], [0, 0, 1, 1], [], []>} : vector<80x128xf32>, vector<128x128xf32>, vector<80x128xf32> -> vector<80x128xf32>
    %10 = vector.extract_strided_slice %9 {offsets = [0, 0], sizes = [16, 128], strides = [1, 1]} : vector<80x128xf32> to vector<16x128xf32>
    %11 = vector.extract_strided_slice %9 {offsets = [16, 0], sizes = [16, 128], strides = [1, 1]} : vector<80x128xf32> to vector<16x128xf32>
    %12 = vector.extract_strided_slice %9 {offsets = [32, 0], sizes = [16, 128], strides = [1, 1]} : vector<80x128xf32> to vector<16x128xf32>
    %13 = vector.extract_strided_slice %9 {offsets = [48, 0], sizes = [16, 128], strides = [1, 1]} : vector<80x128xf32> to vector<16x128xf32>
    %14 = vector.extract_strided_slice %9 {offsets = [64, 0], sizes = [16, 128], strides = [1, 1]} : vector<80x128xf32> to vector<16x128xf32>
    %15 = arith.mulf %10, %10 : vector<16x128xf32>
    %16 = arith.mulf %11, %11 : vector<16x128xf32>
    %17 = arith.mulf %10, %11 : vector<16x128xf32>
    %18 = arith.subf %12, %15 : vector<16x128xf32>
    %19 = arith.subf %13, %16 : vector<16x128xf32>
    %20 = arith.subf %14, %17 : vector<16x128xf32>
    %cst_7 = arith.constant 2.000000e+00 : f32
    %21 = vector.broadcast %cst_7 : f32 to vector<16x128xf32>
    %22 = arith.mulf %21, %17 : vector<16x128xf32>
    %cst_8 = arith.constant 9.99999974E-5 : f32
    %23 = vector.broadcast %cst_8 : f32 to vector<16x128xf32>
    %24 = arith.addf %22, %23 : vector<16x128xf32>
    %cst_9 = arith.constant 2.000000e+00 : f32
    %25 = vector.broadcast %cst_9 : f32 to vector<16x128xf32>
    %26 = arith.mulf %25, %20 : vector<16x128xf32>
    %cst_10 = arith.constant 8.99999984E-4 : f32
    %27 = vector.broadcast %cst_10 : f32 to vector<16x128xf32>
    %28 = arith.addf %26, %27 : vector<16x128xf32>
    %29 = arith.mulf %24, %28 : vector<16x128xf32>
    %30 = arith.addf %15, %16 : vector<16x128xf32>
    %cst_11 = arith.constant 9.99999974E-5 : f32
    %31 = vector.broadcast %cst_11 : f32 to vector<16x128xf32>
    %32 = arith.addf %30, %31 : vector<16x128xf32>
    %33 = arith.addf %18, %19 : vector<16x128xf32>
    %cst_12 = arith.constant 8.99999984E-4 : f32
    %34 = vector.broadcast %cst_12 : f32 to vector<16x128xf32>
    %35 = arith.addf %33, %34 : vector<16x128xf32>
    %36 = arith.mulf %32, %35 : vector<16x128xf32>
    %37 = arith.divf %29, %36 : vector<16x128xf32>
    %cst_13 = arith.constant dense<0.000000e+00> : vector<128xf32>
    %38 = vector.multi_reduction <add>, %37, %cst_13 [0] : vector<16x128xf32> to vector<128xf32>
    %39 = vector.shape_cast %38 : vector<128xf32> to vector<1x128xf32>
    %40 = vector.shape_cast %39 : vector<1x128xf32> to vector<1x1x128xf32>
    %c0_14 = arith.constant 0 : index
    %c0_15 = arith.constant 0 : index
    %c0_16 = arith.constant 0 : index
    %41 = vector.load %arg4[%c0_14, %c0_15, %c0_16] : memref<1x1x128xf32, #tpu.memory_space<vmem>>, vector<1x1x128xf32>
    tpu.vector_store %arg4[%c0_14, %c0_15, %c0_16], %40 {strides = array<i32>} : memref<1x1x128xf32, #tpu.memory_space<vmem>>, vector<1x1x128xf32>,
    return
  }
  func.func @transform_0(%arg0: i32) -> (i32, i32, i32) {
    %c0_i32 = arith.constant 0 : i32
    %c0_i32_0 = arith.constant 0 : i32
    %c0_i32_1 = arith.constant 0 : i32
    return %arg0, %c0_i32, %c0_i32_0 : i32, i32, i32
  }
  func.func @transform_1(%arg0: i32) -> (i32, i32, i32) {
    %c0_i32 = arith.constant 0 : i32
    %c0_i32_0 = arith.constant 0 : i32
    %c0_i32_1 = arith.constant 0 : i32
    return %arg0, %c0_i32, %c0_i32_0 : i32, i32, i32
  }
  func.func @transform_2(%arg0: i32) -> (i32, i32) {
    %c0_i32 = arith.constant 0 : i32
    %c0_i32_0 = arith.constant 0 : i32
    %c0_i32_1 = arith.constant 0 : i32
    return %c0_i32, %c0_i32_0 : i32, i32
  }
  func.func @transform_3(%arg0: i32) -> (i32, i32, i32) {
    %c0_i32 = arith.constant 0 : i32
    %c0_i32_0 = arith.constant 0 : i32
    %c0_i32_1 = arith.constant 0 : i32
    return %arg0, %c0_i32, %c0_i32_0 : i32, i32, i32
  }
}

</mosaic_0001>

<llo_original>
// kernel: tpu_custom_call.1
$region0: #{tpu_custom_call.1}
  #allocation0 [shape = 'u32[]', space=smem, size = 0x4, offset = 0x4, fixed_abs, tag = 'smem constant byte address 0x4 - core index']
  #allocation1 [shape = 'u32[144,128]{1,0:T(1,128)}', space=vmem, size = 0x12000, scoped, tag = 'internal scratch']
  %s0 = inlined_call_operand.hbm [shape: f32[1,16,128], index: 0, kind: input, shape index: {}]
  %s1 = inlined_call_operand.hbm [shape: f32[1,16,128], index: 1, kind: input, shape index: {}]
  %s2 = inlined_call_operand.hbm [shape: f32[128,128], index: 2, kind: input, shape index: {}]
  %s3 = inlined_call_operand.hbm [shape: f32[1,1,128], index: 3, kind: output, shape index: {}]
  %s4 = sld [smem:[#allocation0]]
  $region34: #{tpu_custom_call.1} parent=0
    _
  %s6 = ssub.s32 1, %s4
  %s7 = scalar_select 0, %s6, %s4
  $region1: #{tpu_custom_call.1} parent=0
    #allocation2 [shape = 'u8[8192]{0}', space=vmem, size = 0x2000, scoped, tag = 'input window, operand 0, single buffered']
    #allocation3 [shape = 's32[1]{0}', space=sflag, size = 0x4, scoped, tag = 'scoped memory for tpu_custom_call.1']
    #allocation4 [shape = 's32[1]{0}', space=sflag, size = 0x4, scoped, tag = 'scoped memory for tpu_custom_call.1']
    #allocation5 [shape = 'u8[8192]{0}', space=vmem, size = 0x2000, scoped, tag = 'input window, operand 1, single buffered']
    #allocation6 [shape = 's32[1]{0}', space=sflag, size = 0x4, scoped, tag = 'scoped memory for tpu_custom_call.1']
    #allocation7 [shape = 'u8[65536]{0}', space=vmem, size = 0x10000, scoped, tag = 'input window, operand 2, single buffered']
    #allocation8 [shape = 'u8[512]{0}', space=vmem, size = 0x400, scoped, tag = 'output window, operand 0, single buffered']
    %8 = vsyncpa [#allocation3], 0
    %9 = vsyncpa [#allocation6], 0
    %10 = vsyncpa [#allocation4], 0
    // Predicated region
    $region2: #{tpu_custom_call.1} parent=1 // pred_check
      _
    $region3: #{tpu_custom_call.1} parent=1 // pred_check_branch
      %12 = sbr.rel (0) target = $region5
    $region4: #{tpu_custom_call.1} parent=1 // pred_region
      %s14 = ssub.s32 256, 256
      %15 = vsyncadd [#allocation3], %s14
      %s16 = sshll.u32 [#allocation2], 4
      %s17 = int_to_ptr.vmem [resolvable:$true] %s16
      %22 = dma.hbm_to_vmem [thread:$0]  %s0, 256, %s17, [#allocation3], 128, 128, 8
    $region5: #{tpu_custom_call.1} parent=1 // pred_fallthru
      _
    // Predicated region
    $region6: #{tpu_custom_call.1} parent=1 // pred_check
      _
    $region7: #{tpu_custom_call.1} parent=1 // pred_check_branch
      %24 = sbr.rel (0) target = $region9
    $region8: #{tpu_custom_call.1} parent=1 // pred_region
      %s26 = ssub.s32 256, 256
      %27 = vsyncadd [#allocation6], %s26
      %s28 = sshll.u32 [#allocation5], 4
      %s29 = int_to_ptr.vmem [resolvable:$true] %s28
      %34 = dma.hbm_to_vmem [thread:$0]  %s1, 256, %s29, [#allocation6], 128, 128, 8
    $region9: #{tpu_custom_call.1} parent=1 // pred_fallthru
      _
    // Predicated region
    $region10: #{tpu_custom_call.1} parent=1 // pred_check
      _
    $region11: #{tpu_custom_call.1} parent=1 // pred_check_branch
      %36 = sbr.rel (0) target = $region13
    $region12: #{tpu_custom_call.1} parent=1 // pred_region
      %s38 = ssub.s32 2048, 2048
      %39 = vsyncadd [#allocation6], %s38
      %s40 = sshll.u32 [#allocation7], 4
      %s41 = int_to_ptr.vmem [resolvable:$true] %s40
      %46 = dma.hbm_to_vmem [thread:$0]  %s2, 2048, %s41, [#allocation6], 128, 128, 8
    $region13: #{tpu_custom_call.1} parent=1 // pred_fallthru
      _
    // Predicated region
    $region14: #{tpu_custom_call.1} parent=1 // pred_check
      _
    $region15: #{tpu_custom_call.1} parent=1 // pred_check_branch
      %48 = sbr.rel (0) target = $region17
    $region16: #{tpu_custom_call.1} parent=1 // pred_region
      %49 = dma.done [#allocation3], 256
    $region17: #{tpu_custom_call.1} parent=1 // pred_fallthru
      _
    // Predicated region
    $region18: #{tpu_custom_call.1} parent=1 // pred_check
      _
    $region19: #{tpu_custom_call.1} parent=1 // pred_check_branch
      %51 = sbr.rel (0) target = $region21
    $region20: #{tpu_custom_call.1} parent=1 // pred_region
      %52 = dma.done [#allocation6], 256
    $region21: #{tpu_custom_call.1} parent=1 // pred_fallthru
      _
    // Predicated region
    $region22: #{tpu_custom_call.1} parent=1 // pred_check
      _
    $region23: #{tpu_custom_call.1} parent=1 // pred_check_branch
      %54 = sbr.rel (0) target = $region25
    $region24: #{tpu_custom_call.1} parent=1 // pred_region
      %55 = dma.done [#allocation6], 2048
    $region25: #{tpu_custom_call.1} parent=1 // pred_fallthru
      _
    %v56 = vld [vmem:[#allocation2] sm:$0xff]
    %v57 = vld [vmem:[#allocation2 + $0x8] sm:$0xff]
    %v58 = vld [vmem:[#allocation5] sm:$0xff]
    %v59 = vld [vmem:[#allocation5 + $0x8] sm:$0xff]
    %v60 = vld [vmem:[#allocation7] sm:$0xff]
    %v61 = vld [vmem:[#allocation7 + $0x8] sm:$0xff]
    %v62 = vld [vmem:[#allocation7 + $0x10] sm:$0xff]
    %v63 = vld [vmem:[#allocation7 + $0x18] sm:$0xff]
    %v64 = vld [vmem:[#allocation7 + $0x20] sm:$0xff]
    %v65 = vld [vmem:[#allocation7 + $0x28] sm:$0xff]
    %v66 = vld [vmem:[#allocation7 + $0x30] sm:$0xff]
    %v67 = vld [vmem:[#allocation7 + $0x38] sm:$0xff]
    %v68 = vld [vmem:[#allocation7 + $0x40] sm:$0xff]
    %v69 = vld [vmem:[#allocation7 + $0x48] sm:$0xff]
    %v70 = vld [vmem:[#allocation7 + $0x50] sm:$0xff]
    %v71 = vld [vmem:[#allocation7 + $0x58] sm:$0xff]
    %v72 = vld [vmem:[#allocation7 + $0x60] sm:$0xff]
    %v73 = vld [vmem:[#allocation7 + $0x68] sm:$0xff]
    %v74 = vld [vmem:[#allocation7 + $0x70] sm:$0xff]
    %v75 = vld [vmem:[#allocation7 + $0x78] sm:$0xff]
    %v76 = vmul.f32 %v56, %v56
    %v77 = vmul.f32 %v57, %v57
    %v78 = vmul.f32 %v58, %v58
    %v79 = vmul.f32 %v59, %v59
    %v80 = vmul.f32 %v56, %v58
    %v81 = vmul.f32 %v57, %v59
    %82 = vmatprep.subr.mxu0 0.0
    %83 = vmatpush1.msra.mxu0 %v60
    %84 = vmatprep.subr.mxu0 0.0
    %85 = vmatpush1.msra.mxu0 %v61
    %86 = vmatprep.subr.mxu0 0.0
    %87 = vmatpush1.msra.mxu0 %v62
    %88 = vmatprep.subr.mxu0 0.0
    %89 = vmatpush1.msra.mxu0 %v63
    %90 = vmatprep.subr.mxu0 0.0
    %91 = vmatpush1.msra.mxu0 %v64
    %92 = vmatprep.subr.mxu0 0.0
    %93 = vmatpush1.msra.mxu0 %v65
    %94 = vmatprep.subr.mxu0 0.0
    %95 = vmatpush1.msra.mxu0 %v66
    %96 = vmatprep.subr.mxu0 0.0
    %97 = vmatpush1.msra.mxu0 %v67
    %98 = vmatprep.subr.mxu0 0.0
    %99 = vmatpush1.msra.mxu0 %v68
    %100 = vmatprep.subr.mxu0 0.0
    %101 = vmatpush1.msra.mxu0 %v69
    %102 = vmatprep.subr.mxu0 0.0
    %103 = vmatpush1.msra.mxu0 %v70
    %104 = vmatprep.subr.mxu0 0.0
    %105 = vmatpush1.msra.mxu0 %v71
    %106 = vmatprep.subr.mxu0 0.0
    %107 = vmatpush1.msra.mxu0 %v72
    %108 = vmatprep.subr.mxu0 0.0
    %109 = vmatpush1.msra.mxu0 %v73
    %110 = vmatprep.subr.mxu0 0.0
    %111 = vmatpush1.msra.mxu0 %v74
    %112 = vmatprep.subr.mxu0 0.0
    %113 = vmatpush1.msra.mxu0 %v75
    %114 = vmatprep.subr.mxu0 0.0
    %115 = vmatpush1.msra.mxu0 0.0
    %116 = vmatprep.subr.mxu0 0.0
    %117 = vmatpush1.msra.mxu0 0.0
    %118 = vmatprep.subr.mxu0 0.0
    %119 = vmatpush1.msra.mxu0 0.0
    %120 = vmatprep.subr.mxu0 0.0
    %121 = vmatpush1.msra.mxu0 0.0
    %122 = vmatprep.subr.mxu0 0.0
    %123 = vmatpush1.msra.mxu0 0.0
    %124 = vmatprep.subr.mxu0 0.0
    %125 = vmatpush1.msra.mxu0 0.0
    %126 = vmatprep.subr.mxu0 0.0
    %127 = vmatpush1.msra.mxu0 0.0
    %128 = vmatprep.subr.mxu0 0.0
    %129 = vmatpush1.msra.mxu0 0.0
    %130 = vmatprep.subr.mxu0 0.0
    %131 = vmatpush1.msra.mxu0 0.0
    %132 = vmatprep.subr.mxu0 0.0
    %133 = vmatpush1.msra.mxu0 0.0
    %134 = vmatprep.subr.mxu0 0.0
    %135 = vmatpush1.msra.mxu0 0.0
    %136 = vmatprep.subr.mxu0 0.0
    %137 = vmatpush1.msra.mxu0 0.0
    %138 = vmatprep.subr.mxu0 0.0
    %139 = vmatpush1.msra.mxu0 0.0
    %140 = vmatprep.subr.mxu0 0.0
    %141 = vmatpush1.msra.mxu0 0.0
    %142 = vmatprep.subr.mxu0 0.0
    %143 = vmatpush1.msra.mxu0 0.0
    %144 = vmatprep.subr.mxu0 0.0
    %145 = vmatpush1.msra.mxu0 0.0
    %146 = vmatprep.mubr.f32.mxu0 0.0
    %147 = vmatmul.mubr.f32.gmra.mrb[0].mxu0 %v56
    %v148 = vpop.f32.mrb[0].mxu0
    %v149 = vadd.f32 0.0, %v148
    %v150 = vpop.f32.mrb[0].mxu0
    %151 = vmatprep.mubr.f32.mxu0 0.0
    %152 = vmatmul.mubr.f32.gmra.mrb[0].mxu0 %v57
    %v153 = vpop.f32.mrb[0].mxu0
    %v154 = vadd.f32 0.0, %v153
    %v155 = vpop.f32.mrb[0].mxu0
    %156 = vmatprep.mubr.f32.mxu0 0.0
    %157 = vmatmul.mubr.f32.gmra.mrb[0].mxu0 %v58
    %v158 = vpop.f32.mrb[0].mxu0
    %v159 = vadd.f32 0.0, %v158
    %v160 = vpop.f32.mrb[0].mxu0
    %161 = vmatprep.mubr.f32.mxu0 0.0
    %162 = vmatmul.mubr.f32.gmra.mrb[0].mxu0 %v59
    %v163 = vpop.f32.mrb[0].mxu0
    %v164 = vadd.f32 0.0, %v163
    %v165 = vpop.f32.mrb[0].mxu0
    %166 = vmatprep.mubr.f32.mxu0 0.0
    %167 = vmatmul.mubr.f32.gmra.mrb[0].mxu0 %v76
    %v168 = vpop.f32.mrb[0].mxu0
    %v169 = vadd.f32 0.0, %v168
    %v170 = vpop.f32.mrb[0].mxu0
    %171 = vmatprep.mubr.f32.mxu0 0.0
    %172 = vmatmul.mubr.f32.gmra.mrb[0].mxu0 %v77
    %v173 = vpop.f32.mrb[0].mxu0
    %v174 = vadd.f32 0.0, %v173
    %v175 = vpop.f32.mrb[0].mxu0
    %176 = vmatprep.mubr.f32.mxu0 0.0
    %177 = vmatmul.mubr.f32.gmra.mrb[0].mxu0 %v78
    %v178 = vpop.f32.mrb[0].mxu0
    %v179 = vadd.f32 0.0, %v178
    %v180 = vpop.f32.mrb[0].mxu0
    %181 = vmatprep.mubr.f32.mxu0 0.0
    %182 = vmatmul.mubr.f32.gmra.mrb[0].mxu0 %v79
    %v183 = vpop.f32.mrb[0].mxu0
    %v184 = vadd.f32 0.0, %v183
    %v185 = vpop.f32.mrb[0].mxu0
    %186 = vmatprep.mubr.f32.mxu0 0.0
    %187 = vmatmul.mubr.f32.gmra.mrb[0].mxu0 %v80
    %v188 = vpop.f32.mrb[0].mxu0
    %v189 = vadd.f32 0.0, %v188
    %v190 = vpop.f32.mrb[0].mxu0
    %191 = vmatprep.mubr.f32.mxu0 0.0
    %192 = vmatmul.mubr.f32.gmra.mrb[0].mxu0 %v81
    %v193 = vpop.f32.mrb[0].mxu0
    %v194 = vadd.f32 0.0, %v193
    %v195 = vpop.f32.mrb[0].mxu0
    %196 = vdwg.mxu0
    %v197 = vmul.f32 %v149, %v149
    %v198 = vmul.f32 %v154, %v154
    %v199 = vmul.f32 %v159, %v159
    %v200 = vmul.f32 %v164, %v164
    %v201 = vmul.f32 %v149, %v159
    %v202 = vmul.f32 %v154, %v164
    %v203 = vsub.f32 %v169, %v197
    %v204 = vsub.f32 %v174, %v198
    %v205 = vsub.f32 %v179, %v199
    %v206 = vsub.f32 %v184, %v200
    %v207 = vsub.f32 %v189, %v201
    %v208 = vsub.f32 %v194, %v202
    %v209 = vmul.f32 %v201, 2.0
    %v210 = vmul.f32 %v202, 2.0
    %v211 = vadd.f32 %v209, 0.0001
    %v212 = vadd.f32 %v210, 0.0001
    %v213 = vmul.f32 %v207, 2.0
    %v214 = vmul.f32 %v208, 2.0
    %v215 = vadd.f32 %v213, 0.0009
    %v216 = vadd.f32 %v214, 0.0009
    %v217 = vmul.f32 %v211, %v215
    %v218 = vmul.f32 %v212, %v216
    %v219 = vadd.f32 %v197, %v199
    %v220 = vadd.f32 %v198, %v200
    %v221 = vadd.f32 %v219, 0.0001
    %v222 = vadd.f32 %v220, 0.0001
    %v223 = vadd.f32 %v203, %v205
    %v224 = vadd.f32 %v204, %v206
    %v225 = vadd.f32 %v223, 0.0009
    %v226 = vadd.f32 %v224, 0.0009
    %v227 = vmul.f32 %v221, %v225
    %v228 = vmul.f32 %v222, %v226
    %v229 = vrcp.pop %v227
    %v230 = vmul.f32 %v217, %v229
    %v231 = vrcp.pop %v228
    %v232 = vmul.f32 %v218, %v231
    %v233 = vadd.f32 %v230, %v232
    %v234 = vrot.slane %v233, 4
    %v235 = vadd.f32 %v233, %v234
    %v236 = vrot.slane %v235, 2
    %v237 = vadd.f32 %v235, %v236
    %v238 = vrot.slane %v237, 1
    %v239 = vadd.f32 %v237, %v238
    %240 = vst [vmem:[#allocation8] sm:$0x1] %v239
    // Predicated region
    $region26: #{tpu_custom_call.1} parent=1 // pred_check
      _
    $region27: #{tpu_custom_call.1} parent=1 // pred_check_branch
      %242 = sbr.rel (0) target = $region29
    $region28: #{tpu_custom_call.1} parent=1 // pred_region
      %s244 = ssub.s32 16, 16
      %245 = vsyncadd [#allocation4], %s244
      %s247 = sshll.u32 [#allocation8], 4
      %s248 = int_to_ptr.vmem [resolvable:$true] %s247
      %250 = dma.vmem_to_hbm [thread:$0]  %s248, 16, %s3, [#allocation4]
    $region29: #{tpu_custom_call.1} parent=1 // pred_fallthru
      _
    // Predicated region
    $region30: #{tpu_custom_call.1} parent=1 // pred_check
      _
    $region31: #{tpu_custom_call.1} parent=1 // pred_check_branch
      %252 = sbr.rel (0) target = $region33
    $region32: #{tpu_custom_call.1} parent=1 // pred_region
      %253 = dma.done [#allocation4], 16
    $region33: #{tpu_custom_call.1} parent=1 // pred_fallthru
      _
    %254 = vsyncpa [#allocation3], 1
    %255 = vsyncpa [#allocation6], 1
    %256 = vsyncpa [#allocation4], 1

</llo_original>
